<compile_context>
chip_gen: v5e
topology: v5e:2x2
jax: 0.10.0
libtpu: 0.0.40
codegen_flags: <defaults>
</compile_context>

<pallas_src>
import functools

import jax
import jax.numpy as jnp
from jax import lax
from jax.experimental import pallas as pl
from jax.experimental.pallas import tpu as pltpu


# ------------------------- input-projection kernel ---------------------------
# gates_x[h, t, b, :] = cast_bf16(x[h or 0, t, b, :]) @ W_ih[h] + bias[h]
def _input_proj_kernel(x_ref, w_ref, b_ref, gx_ref):
    _, t_chunk, bp, din = x_ref.shape
    x = x_ref[0].reshape(t_chunk * bp, din).astype(jnp.bfloat16)
    y = jnp.dot(x, w_ref[0], preferred_element_type=jnp.float32)     # (T_CHUNK*Bp, 4H)
    y = y + b_ref[0]                                                  # (1, 4H) broadcast
    gx_ref[0] = y.reshape(t_chunk, bp, -1)


def input_projection(x, w_ih, b, *, t_chunk):
    """x: (HX, Tp, Bp, Din) f32 with HX in {1, dim_y}; w_ih: (dim_y, Din, 4H) bf16;
    b: (dim_y, 1, 4H) f32  ->  (dim_y, Tp, Bp, 4H) f32."""
    hx, tp, bp, din = x.shape
    dim_y, _, g4 = w_ih.shape
    n_chunks = tp // t_chunk

    def x_map(h, c):
        # Layer 0 shares one input X across all heads; later layers are per-head.
        return (h if hx > 1 else 0, c, 0, 0)

    return pl.pallas_call(
        _input_proj_kernel,
        out_shape=jax.ShapeDtypeStruct((dim_y, tp, bp, g4), jnp.float32),
        grid=(dim_y, n_chunks),
        in_specs=[
            pl.BlockSpec((1, t_chunk, bp, din), x_map),
            pl.BlockSpec((1, din, g4), lambda h, c: (h, 0, 0)),
            pl.BlockSpec((1, 1, g4), lambda h, c: (h, 0, 0)),
        ],
        out_specs=pl.BlockSpec((1, t_chunk, bp, g4), lambda h, c: (h, c, 0, 0)),
        compiler_params=pltpu.CompilerParams(
            dimension_semantics=("parallel", "parallel"),
            vmem_limit_bytes=48 * 1024 * 1024),
    )(x, w_ih, b)


# --------------------------- recurrent LSTM kernel ----------------------------
def _lstm_recurrent_kernel(gx_ref, whh_hbm, hseq_ref, w_sc, h_sc, c_sc, dma_sem,
                           *, hidden, t_chunk):
    head = pl.program_id(0)
    chunk = pl.program_id(1)

    @pl.when(chunk == 0)
    def _():
        # New head: reset state and stage this head's W_hh once (single-buffered
        # in VMEM scratch; the HBM copy stays un-double-buffered via pl.ANY).
        h_sc[...] = jnp.zeros_like(h_sc)
        c_sc[...] = jnp.zeros_like(c_sc)
        cp = pltpu.make_async_copy(whh_hbm.at[head], w_sc, dma_sem)
        cp.start()
        cp.wait()

    w = w_sc[...]                      # (H, 4H) bf16, resident for the whole head
    h = h_sc[...]                      # (Bp, H) f32
    c = c_sc[...]                      # (Bp, H) f32

    # Fully unrolled static loop over the time chunk (trace-time unroll; the
    # per-step x @ W_ih contribution was hoisted into gates_x already).
    for t in range(t_chunk):
        g = gx_ref[0, t] + jnp.dot(h.astype(jnp.bfloat16), w,
                                   preferred_element_type=jnp.float32)   # (Bp, 4H)
        i_g = jax.nn.sigmoid(g[:, 0 * hidden:1 * hidden])
        f_g = jax.nn.sigmoid(g[:, 1 * hidden:2 * hidden])
        g_g = jnp.tanh(g[:, 2 * hidden:3 * hidden])
        o_g = jax.nn.sigmoid(g[:, 3 * hidden:4 * hidden])
        c = f_g * c + i_g * g_g
        h = o_g * jnp.tanh(c)
        hseq_ref[0, t] = h

    h_sc[...] = h
    c_sc[...] = c


def lstm_recurrence(gates_x, w_hh, *, t_chunk):
    """gates_x: (dim_y, Tp, Bp, 4H) f32; w_hh: (dim_y, H, 4H) bf16
    -> hseq: (dim_y, Tp, Bp, H) f32."""
    dim_y, tp, bp, g4 = gates_x.shape
    hidden = w_hh.shape[1]
    n_chunks = tp // t_chunk
    kernel = functools.partial(_lstm_recurrent_kernel, hidden=hidden, t_chunk=t_chunk)
    return pl.pallas_call(
        kernel,
        out_shape=jax.ShapeDtypeStruct((dim_y, tp, bp, hidden), jnp.float32),
        grid=(dim_y, n_chunks),
        in_specs=[
            pl.BlockSpec((1, t_chunk, bp, g4), lambda h, c: (h, c, 0, 0)),
            pl.BlockSpec(memory_space=pl.ANY),     # W_hh stays in HBM; staged manually
        ],
        out_specs=pl.BlockSpec((1, t_chunk, bp, hidden), lambda h, c: (h, c, 0, 0)),
        scratch_shapes=[
            pltpu.VMEM((hidden, g4), jnp.bfloat16),   # single-buffered W_hh
            pltpu.VMEM((bp, hidden), jnp.float32),    # h state (persists across chunks)
            pltpu.VMEM((bp, hidden), jnp.float32),    # c state
            pltpu.SemaphoreType.DMA(()),
        ],
        compiler_params=pltpu.CompilerParams(
            # head axis parallel (megacore on v7x), time axis is a true recurrence
            dimension_semantics=("parallel", "arbitrary"),
            vmem_limit_bytes=48 * 1024 * 1024),
    )(gates_x, w_hh)


# ------------------------------- head projection ------------------------------
def head_projection(hseq, fc_w, fc_b):
    """hseq: (dim_y, T, B, H); fc_w: (dim_y, H); fc_b: (dim_y,) -> (T, B, dim_y).
    Left to plain XLA: a lane-width-1 per-head output is a poor Pallas store
    pattern (masked vst), and XLA fuses this trivially."""
    return jnp.einsum("htbk,hk->tbh", hseq, fc_w) + fc_b[None, None, :]


# ----------------------------------- module -----------------------------------
class LongShortTermMemory:
    def __init__(self, dim_X, dim_y, lstm=(1024,), key=None, t_chunk=8):
        if key is None:
            key = jax.random.PRNGKey(0)
        self.dim_X = dim_X
        self.dim_y = dim_y
        self.t_chunk = t_chunk
        self.net_lstm = [dim_X] + list(lstm)
        self.layers = []
        for j in range(len(lstm)):
            din, h = self.net_lstm[j], self.net_lstm[j + 1]
            key, k1, k2, k3, k4 = jax.random.split(key, 5)
            bound = 1.0 / (h ** 0.5)
            w_ih = jax.random.uniform(k1, (dim_y, din, 4 * h), jnp.float32, -bound, bound)
            w_hh = jax.random.uniform(k2, (dim_y, h, 4 * h), jnp.float32, -bound, bound)
            b_ih = jax.random.uniform(k3, (dim_y, 1, 4 * h), jnp.float32, -bound, bound)
            b_hh = jax.random.uniform(k4, (dim_y, 1, 4 * h), jnp.float32, -bound, bound)
            self.layers.append((w_ih.astype(jnp.bfloat16),
                                w_hh.astype(jnp.bfloat16),
                                b_ih + b_hh))
        key, k5, k6 = jax.random.split(key, 3)
        h_last = lstm[-1]
        bound = 1.0 / (h_last ** 0.5)
        self.fc_w = jax.random.uniform(k5, (dim_y, h_last), jnp.float32, -bound, bound)
        self.fc_b = jax.random.uniform(k6, (dim_y,), jnp.float32, -bound, bound)

    def __call__(self, X):
        T, B, _ = X.shape
        tc = self.t_chunk
        Tp = -(-T // tc) * tc          # pad time to a multiple of the chunk
        Bp = -(-B // 8) * 8            # pad batch to the f32 sublane multiple
        Xp = jnp.pad(X.astype(jnp.float32), ((0, Tp - T), (0, Bp - B), (0, 0)))
        feat = Xp[None]                # (1, Tp, Bp, Din) shared across heads
        for w_ih, w_hh, b in self.layers:
            gx = input_projection(feat, w_ih, b, t_chunk=tc)   # (dim_y, Tp, Bp, 4H)
            feat = lstm_recurrence(gx, w_hh, t_chunk=tc)       # (dim_y, Tp, Bp, H)
        out = head_projection(feat, self.fc_w, self.fc_b)      # (Tp, Bp, dim_y)
        return out[:T, :B, :]


# ---------------------------- pure-JAX reference -------------------------------
def forward_ref(model, X):
    feat = X.astype(jnp.float32)[None]          # (1, T, B, Din)
    for w_ih, w_hh, b in model.layers:
        dim_y = w_ih.shape[0]
        H = w_hh.shape[1]
        outs = []
        for hi in range(dim_y):
            x_h = feat[0] if feat.shape[0] == 1 else feat[hi]
            gx = jnp.dot(x_h.astype(jnp.bfloat16), w_ih[hi],
                         preferred_element_type=jnp.float32) + b[hi]

            def step(carry, g_x_t):
                hh, cc = carry
                g = g_x_t + jnp.dot(hh.astype(jnp.bfloat16), w_hh[hi],
                                    preferred_element_type=jnp.float32)
                i = jax.nn.sigmoid(g[:, :H])
                f = jax.nn.sigmoid(g[:, H:2 * H])
                gg = jnp.tanh(g[:, 2 * H:3 * H])
                o = jax.nn.sigmoid(g[:, 3 * H:])
                cc = f * cc + i * gg
                hh = o * jnp.tanh(cc)
                return (hh, cc), hh

            Bsz = x_h.shape[1]
            (_, _), hs = lax.scan(
                step,
                (jnp.zeros((Bsz, H), jnp.float32), jnp.zeros((Bsz, H), jnp.float32)),
                gx)
            outs.append(hs)
        feat = jnp.stack(outs, axis=0)          # (dim_y, T, B, H)
    return jnp.einsum("htbk,hk->tbh", feat, model.fc_w) + model.fc_b[None, None, :]


# ------------------------------------ main -------------------------------------
if __name__ == "__main__":
    T, B, D = 8, 4, 16      # seq_len, batch, input features (dim_X)
    HID = 32                # hidden size (small stand-in for default 1024)
    DIM_Y = 2               # number of output heads

    key = jax.random.PRNGKey(0)
    k_x, k_p = jax.random.split(key)
    X = jax.random.normal(k_x, (T, B, D), dtype=jnp.float32)

    model = LongShortTermMemory(dim_X=D, dim_y=DIM_Y, lstm=(HID,), key=k_p, t_chunk=8)

    out = jax.block_until_ready(model(X))
    assert out.shape == (T, B, DIM_Y), out.shape

    ref = jax.block_until_ready(forward_ref(model, X))
    err = float(jnp.max(jnp.abs(out - ref)))
    assert err < 2e-3, err

    print("KERNEL_OK")
</pallas_src>

<mosaic_0001>
module attributes {stable_mosaic.version = 11 : i64} {
  func.func @_input_proj_kernel(%arg0: i32, %arg1: i32, %arg2: memref<1x8x8x16xf32, #tpu.memory_space<vmem>>, %arg3: memref<1x16x128xbf16, #tpu.memory_space<vmem>>, %arg4: memref<1x1x128xf32, #tpu.memory_space<vmem>>, %arg5: memref<1x8x8x128xf32, #tpu.memory_space<vmem>>) attributes {dimension_semantics = [#tpu.dimension_semantics<parallel>, #tpu.dimension_semantics<parallel>], iteration_bounds = array<i64: 2, 1>, scalar_prefetch = 0 : i64, scratch_operands = 0 : i64, tpu.core_type = #tpu.core_type<tc>, window_params = [{transform_indices = @transform_0, window_bounds = array<i64: 1, 8, 8, 16>}, {transform_indices = @transform_1, window_bounds = array<i64: 1, 16, 128>}, {transform_indices = @transform_2, window_bounds = array<i64: 1, 1, 128>}, {transform_indices = @transform_3, window_bounds = array<i64: 1, 8, 8, 128>}]} {
    %c0 = arith.constant 0 : index
    %c0_0 = arith.constant 0 : index
    %c0_1 = arith.constant 0 : index
    %c0_2 = arith.constant 0 : index
    %0 = vector.load %arg2[%c0, %c0_0, %c0_1, %c0_2] : memref<1x8x8x16xf32, #tpu.memory_space<vmem>>, vector<1x8x8x16xf32>
    %1 = vector.shape_cast %0 : vector<1x8x8x16xf32> to vector<8x8x16xf32>
    %2 = vector.shape_cast %1 : vector<8x8x16xf32> to vector<64x16xf32>
    %3 = arith.truncf %2 : vector<64x16xf32> to vector<64x16xbf16>
    %c0_3 = arith.constant 0 : index
    %c0_4 = arith.constant 0 : index
    %c0_5 = arith.constant 0 : index
    %4 = vector.load %arg3[%c0_3, %c0_4, %c0_5] : memref<1x16x128xbf16, #tpu.memory_space<vmem>>, vector<1x16x128xbf16>
    %5 = vector.shape_cast %4 : vector<1x16x128xbf16> to vector<16x128xbf16>
    %cst = arith.constant dense<0.000000e+00> : vector<64x128xf32>
    %6 = tpu.matmul %3, %5, %cst {dimension_numbers = #tpu.dot_dimension_numbers<[1], [0], [0], [1], [0, 0, 1, 1], [], []>} : vector<64x16xbf16>, vector<16x128xbf16>, vector<64x128xf32> -> vector<64x128xf32>
    %c0_6 = arith.constant 0 : index
    %c0_7 = arith.constant 0 : index
    %c0_8 = arith.constant 0 : index
    %7 = vector.load %arg4[%c0_6, %c0_7, %c0_8] : memref<1x1x128xf32, #tpu.memory_space<vmem>>, vector<1x1x128xf32>
    %8 = vector.shape_cast %7 : vector<1x1x128xf32> to vector<1x128xf32>
    %9 = vector.broadcast %8 : vector<1x128xf32> to vector<64x128xf32>
    %10 = arith.addf %6, %9 : vector<64x128xf32>
    %11 = vector.shape_cast %10 : vector<64x128xf32> to vector<8x8x128xf32>
    %c0_9 = arith.constant 0 : index
    %c0_10 = arith.constant 0 : index
    %c0_11 = arith.constant 0 : index
    %c0_12 = arith.constant 0 : index
    %12 = vector.load %arg5[%c0_9, %c0_10, %c0_11, %c0_12] : memref<1x8x8x128xf32, #tpu.memory_space<vmem>>, vector<1x8x8x128xf32>
    %13 = vector.shape_cast %12 : vector<1x8x8x128xf32> to vector<8x8x128xf32>
    %14 = vector.shape_cast %11 : vector<8x8x128xf32> to vector<1x8x8x128xf32>
    tpu.vector_store %arg5[%c0_9, %c0_10, %c0_11, %c0_12], %14 {strides = array<i32>} : memref<1x8x8x128xf32, #tpu.memory_space<vmem>>, vector<1x8x8x128xf32>,
    return
  }
  func.func @transform_0(%arg0: i32, %arg1: i32) -> (i32, i32, i32, i32) {
    %c0_i32 = arith.constant 0 : i32
    %c0_i32_0 = arith.constant 0 : i32
    %c0_i32_1 = arith.constant 0 : i32
    %c0_i32_2 = arith.constant 0 : i32
    return %c0_i32, %arg1, %c0_i32_0, %c0_i32_1 : i32, i32, i32, i32
  }
  func.func @transform_1(%arg0: i32, %arg1: i32) -> (i32, i32, i32) {
    %c0_i32 = arith.constant 0 : i32
    %c0_i32_0 = arith.constant 0 : i32
    %c0_i32_1 = arith.constant 0 : i32
    return %arg0, %c0_i32, %c0_i32_0 : i32, i32, i32
  }
  func.func @transform_2(%arg0: i32, %arg1: i32) -> (i32, i32, i32) {
    %c0_i32 = arith.constant 0 : i32
    %c0_i32_0 = arith.constant 0 : i32
    %c0_i32_1 = arith.constant 0 : i32
    return %arg0, %c0_i32, %c0_i32_0 : i32, i32, i32
  }
  func.func @transform_3(%arg0: i32, %arg1: i32) -> (i32, i32, i32, i32) {
    %c0_i32 = arith.constant 0 : i32
    %c0_i32_0 = arith.constant 0 : i32
    %c0_i32_1 = arith.constant 0 : i32
    return %arg0, %arg1, %c0_i32, %c0_i32_0 : i32, i32, i32, i32
  }
}

</mosaic_0001>

<llo_original>
// kernel: tpu_custom_call.1
$region0: #{tpu_custom_call.1}
  #allocation0 [shape = 'u32[]', space=smem, size = 0x4, offset = 0x4, fixed_abs, tag = 'smem constant byte address 0x4 - core index']
  #allocation1 [shape = 'u32[72,128]{1,0:T(1,128)}', space=vmem, size = 0x9000, scoped, tag = 'internal scratch']
  %s0 = inlined_call_operand.hbm [shape: f32[1,8,8,16], index: 0, kind: input, shape index: {}]
  %s1 = inlined_call_operand.hbm [shape: bf16[2,16,128], index: 1, kind: input, shape index: {}]
  %s2 = inlined_call_operand.hbm [shape: f32[2,1,128], index: 2, kind: input, shape index: {}]
  %s3 = inlined_call_operand.hbm [shape: f32[2,8,8,128], index: 3, kind: output, shape index: {}]
  %s4 = sld [smem:[#allocation0]]
  $region57: #{tpu_custom_call.1} parent=0
    _
  %s6 = ssub.s32 1, %s4
  %s7 = scalar_select 0, %s6, %s4
  $region1: #{tpu_custom_call.1} parent=0
    #allocation2 [shape = 'u8[32768]{0}', space=vmem, size = 0x8000, scoped, tag = 'input window, operand 0, single buffered']
    #allocation3 [shape = 's32[2]{0}', space=sflag, size = 0x8, scoped, tag = 'scoped memory for tpu_custom_call.1']
    #allocation4 [shape = 's32[2]{0}', space=sflag, size = 0x8, scoped, tag = 'scoped memory for tpu_custom_call.1']
    #allocation5 [shape = 'u8[8192]{0}', space=vmem, size = 0x2000, scoped, tag = 'input window, operand 1']
    #allocation6 [shape = 's32[2]{0}', space=sflag, size = 0x8, scoped, tag = 'scoped memory for tpu_custom_call.1']
    #allocation7 [shape = 'u8[1024]{0}', space=vmem, size = 0x400, scoped, tag = 'input window, operand 2']
    #allocation8 [shape = 'u8[65536]{0}', space=vmem, size = 0x10000, scoped, tag = 'output window, operand 0']
    %8 = vsyncpa [#allocation3], 0
    %9 = vsyncpa [#allocation6], 0
    %s10 = scalar_lea.sflag [#allocation6], 1
    %11 = vsyncpa %s10, 0
    %12 = vsyncpa [#allocation4], 0
    %s13 = scalar_lea.sflag [#allocation4], 1
    %14 = vsyncpa %s13, 0
    loop: start=0, step=1, limit=4
    $region2: #{tpu_custom_call.1} parent=1 // loop_pre_header
      _
    $region3: #{tpu_custom_call.1} parent=1 // loop_header
      %s16 = sphi 0, %s20
      %p17 = scmp.ge.s32.totalorder %s16, 4
      %s23 = sphi 0, %s35
      %s24 = sphi 0, %s31
      %s25 = sphi 0, %s23
      %s26 = sphi 0, %s24
      %s27 = sphi 0, %s25
      %s28 = sphi 0, %s26
      %s38 = sphi 0, %s40
      %s41 = sphi 0, %s38
      %s42 = sphi 0, %s41
      %s58 = sphi 0, %s42
      %s64 = sphi 0, %s66
      %s67 = sphi 0, %s64
      %s68 = sphi 0, %s67
      %s84 = sphi 0, %s68
      %s90 = sphi 0, %s92
      %s93 = sphi 0, %s90
      %s94 = sphi 0, %s93
      %s110 = sphi 0, %s94
      %s118 = sphi 0, %s120
      %s121 = sphi 0, %s118
      %s122 = sphi 0, %s121
      %s138 = sphi 0, %s122
    $region4: #{tpu_custom_call.1} parent=1 // loop_header_branch
      %19 = sbr.rel (%p17) target = $region8
    $region5: #{tpu_custom_call.1} parent=1 // loop_body
      %s21 = ssub.s32 %s16, 1
      %s22 = ssub.s32 %s16, 2
      %s29 = sadd.s32 1, %s24
      %p30 = scmp.ge.s32.totalorder %s29, 1
      %s31 = scalar_select %p30, 0, %s29
      %s32 = sadd.s32 1, %s23
      %s33 = scalar_select %p30, %s32, %s23
      %p34 = scmp.ge.s32.totalorder %s33, 2
      %s35 = scalar_select %p34, 0, %s33
      %s36 = ssub.s32 %s24, %s31
      %p37 = scmp.eq.s32.totalorder %s36, 0
      %s39 = sadd.s32 %s38, 1
      %s40 = scalar_select %p37, %s38, %s39
      %p43 = pneg %p37
      %p44 = scmp.eq.s32.totalorder %s16, 1
      %p45 = por %p43, %p44
      %p46 = scmp.ne.s32.totalorder %s38, %s41
      %p47 = scmp.eq.s32.totalorder %s16, 0
      %p48 = por %p46, %p47
      %p49 = scmp.ne.s32.totalorder %s38, %s41
      %p50 = scmp.eq.s32.totalorder %s21, 1
      %p51 = por %p49, %p50
      %p52 = scmp.ne.s32.totalorder %s41, %s42
      %p53 = scmp.eq.s32.totalorder %s21, 0
      %p54 = por %p52, %p53
      %p55 = scmp.ne.s32.totalorder %s41, %s42
      %p56 = scmp.eq.s32.totalorder %s22, 1
      %p57 = por %p55, %p56
      %p59 = scmp.ne.s32.totalorder %s42, %s58
      %p60 = scmp.eq.s32.totalorder %s22, 0
      %p61 = por %p59, %p60
      %s62 = ssub.s32 %s23, %s35
      %p63 = scmp.eq.s32.totalorder %s62, 0
      %s65 = sadd.s32 %s64, 1
      %s66 = scalar_select %p63, %s64, %s65
      %p69 = pneg %p63
      %p70 = scmp.eq.s32.totalorder %s16, 1
      %p71 = por %p69, %p70
      %p72 = scmp.ne.s32.totalorder %s64, %s67
      %p73 = scmp.eq.s32.totalorder %s16, 0
      %p74 = por %p72, %p73
      %p75 = scmp.ne.s32.totalorder %s64, %s67
      %p76 = scmp.eq.s32.totalorder %s21, 1
      %p77 = por %p75, %p76
      %p78 = scmp.ne.s32.totalorder %s67, %s68
      %p79 = scmp.eq.s32.totalorder %s21, 0
      %p80 = por %p78, %p79
      %p81 = scmp.ne.s32.totalorder %s67, %s68
      %p82 = scmp.eq.s32.totalorder %s22, 1
      %p83 = por %p81, %p82
      %p85 = scmp.ne.s32.totalorder %s68, %s84
      %p86 = scmp.eq.s32.totalorder %s22, 0
      %p87 = por %p85, %p86
      %s88 = ssub.s32 %s23, %s35
      %p89 = scmp.eq.s32.totalorder %s88, 0
      %s91 = sadd.s32 %s90, 1
      %s92 = scalar_select %p89, %s90, %s91
      %p95 = pneg %p89
      %p96 = scmp.eq.s32.totalorder %s16, 1
      %p97 = por %p95, %p96
      %p98 = scmp.ne.s32.totalorder %s90, %s93
      %p99 = scmp.eq.s32.totalorder %s16, 0
      %p100 = por %p98, %p99
      %p101 = scmp.ne.s32.totalorder %s90, %s93
      %p102 = scmp.eq.s32.totalorder %s21, 1
      %p103 = por %p101, %p102
      %p104 = scmp.ne.s32.totalorder %s93, %s94
      %p105 = scmp.eq.s32.totalorder %s21, 0
      %p106 = por %p104, %p105
      %p107 = scmp.ne.s32.totalorder %s93, %s94
      %p108 = scmp.eq.s32.totalorder %s22, 1
      %p109 = por %p107, %p108
      %p111 = scmp.ne.s32.totalorder %s94, %s110
      %p112 = scmp.eq.s32.totalorder %s22, 0
      %p113 = por %p111, %p112
      %s114 = ssub.s32 %s23, %s35
      %s115 = ssub.s32 %s24, %s31
      %s116 = sor.u32 %s114, %s115
      %p117 = scmp.eq.s32.totalorder %s116, 0
      %s119 = sadd.s32 %s118, 1
      %s120 = scalar_select %p117, %s118, %s119
      %p123 = pneg %p117
      %p124 = scmp.eq.s32.totalorder %s16, 1
      %p125 = por %p123, %p124
      %p126 = scmp.ne.s32.totalorder %s118, %s121
      %p127 = scmp.eq.s32.totalorder %s16, 0
      %p128 = por %p126, %p127
      %p129 = scmp.ne.s32.totalorder %s118, %s121
      %p130 = scmp.eq.s32.totalorder %s21, 1
      %p131 = por %p129, %p130
      %p132 = scmp.ne.s32.totalorder %s121, %s122
      %p133 = scmp.eq.s32.totalorder %s21, 0
      %p134 = por %p132, %p133
      %p135 = scmp.ne.s32.totalorder %s121, %s122
      %p136 = scmp.eq.s32.totalorder %s22, 1
      %p137 = por %p135, %p136
      %p139 = scmp.ne.s32.totalorder %s122, %s138
      %p140 = scmp.eq.s32.totalorder %s22, 0
      %p141 = por %p139, %p140
      %p142 = scmp.le.s32.totalorder 1, %s16
      %p143 = scmp.lt.s32.totalorder %s16, 3
      %p144 = pnand %p142, %p143
      %p145 = pneg %p144
      // Predicated region
      $region9: #{tpu_custom_call.1} parent=5 // pred_check
        _
      $region10: #{tpu_custom_call.1} parent=5 // pred_check_branch
        %147 = sbr.rel (%p144) target = $region12
      $region11: #{tpu_custom_call.1} parent=5 // pred_region
        %s148 = ssub.s32 %s16, 1
        // Predicated region
        $region13: #{tpu_custom_call.1} parent=11 // pred_check
          %p149 = pneg %p54
        $region14: #{tpu_custom_call.1} parent=11 // pred_check_branch
          %151 = sbr.rel (%p149) target = $region16
        $region15: #{tpu_custom_call.1} parent=11 // pred_region
          %s152 = smul.u32 8, %s26
          %154 = vsyncadd [#allocation3], 0
          %s155 = smul.addr %s152, 8
          %s156 = scalar_lea.hbm %s0, %s155
          %s157 = sshll.u32 %s156, 4
          %s158 = int_to_ptr.hbm [resolvable:$true] %s157
          %s159 = sshll.u32 [#allocation2], 4
          %s160 = int_to_ptr.vmem [resolvable:$true] %s159
          %165 = dma.hbm_to_vmem [thread:$0]  %s158, 1024, %s160, [#allocation3], 128, 128, 8
        $region16: #{tpu_custom_call.1} parent=11 // pred_fallthru
          _
      $region12: #{tpu_custom_call.1} parent=5 // pred_fallthru
        _
      %p166 = scmp.lt.s32.totalorder %s16, 2
      // Predicated region
      $region17: #{tpu_custom_call.1} parent=5 // pred_check
        %p167 = pneg %p166
      $region18: #{tpu_custom_call.1} parent=5 // pred_check_branch
        %169 = sbr.rel (%p167) target = $region20
      $region19: #{tpu_custom_call.1} parent=5 // pred_region
        // Predicated region
        $region21: #{tpu_custom_call.1} parent=19 // pred_check
          %p170 = pneg %p74
        $region22: #{tpu_custom_call.1} parent=19 // pred_check_branch
          %172 = sbr.rel (%p170) target = $region24
        $region23: #{tpu_custom_call.1} parent=19 // pred_region
          %s173 = sand.u32 %s16, 1
          %s174 = scalar_lea.sflag [#allocation6], %s173
          %s175 = sand.u32 %s64, 1
          %s176 = smul.addr %s175, 8
          %s177 = scalar_lea.vmem [#allocation5], %s176
          %179 = vsyncadd %s174, 0
          %s180 = smul.addr %s23, 2
          %s181 = smul.addr %s180, 4
          %s182 = scalar_lea.hbm %s1, %s181
          %s183 = sshll.u32 %s182, 4
          %s184 = int_to_ptr.hbm [resolvable:$true] %s183
          %s185 = sshll.u32 %s177, 4
          %s186 = int_to_ptr.vmem [resolvable:$true] %s185
          %191 = dma.hbm_to_vmem [thread:$0]  %s184, 128, %s186, %s174, 64, 64, 4
        $region24: #{tpu_custom_call.1} parent=19 // pred_fallthru
          _
        // Predicated region
        $region25: #{tpu_custom_call.1} parent=19 // pred_check
          %p192 = pneg %p100
        $region26: #{tpu_custom_call.1} parent=19 // pred_check_branch
          %194 = sbr.rel (%p192) target = $region28
        $region27: #{tpu_custom_call.1} parent=19 // pred_region
          %s195 = sand.u32 %s16, 1
          %s196 = scalar_lea.sflag [#allocation6], %s195
          %s197 = sand.u32 %s90, 1
          %s198 = scalar_lea.vmem [#allocation7], %s197
          %200 = vsyncadd %s196, 0
          %s201 = scalar_lea.hbm %s2, %s23
          %s203 = sshll.u32 %s201, 4
          %s204 = int_to_ptr.hbm [resolvable:$true] %s203
          %s205 = sshll.u32 %s198, 4
          %s206 = int_to_ptr.vmem [resolvable:$true] %s205
          %208 = dma.hbm_to_vmem [thread:$0]  %s204, 16, %s206, %s196
        $region28: #{tpu_custom_call.1} parent=19 // pred_fallthru
          _
      $region20: #{tpu_custom_call.1} parent=5 // pred_fallthru
        _
      %p209 = scmp.le.s32.totalorder 1, %s16
      %p210 = scmp.lt.s32.totalorder %s16, 3
      %p211 = pnand %p209, %p210
      %p212 = pneg %p211
      // Predicated region
      $region29: #{tpu_custom_call.1} parent=5 // pred_check
        _
      $region30: #{tpu_custom_call.1} parent=5 // pred_check_branch
        %214 = sbr.rel (%p211) target = $region32
      $region31: #{tpu_custom_call.1} parent=5 // pred_region
        %s215 = ssub.s32 %s16, 1
        // Predicated region
        $region33: #{tpu_custom_call.1} parent=31 // pred_check
          %p216 = pneg %p54
        $region34: #{tpu_custom_call.1} parent=31 // pred_check_branch
          %218 = sbr.rel (%p216) target = $region36
        $region35: #{tpu_custom_call.1} parent=31 // pred_region
          %220 = dma.done [#allocation3], 1024
        $region36: #{tpu_custom_call.1} parent=31 // pred_fallthru
          _
        %s221 = sand.u32 %s21, 1
        %s222 = scalar_lea.sflag [#allocation6], %s221
        %s223 = sand.u32 %s67, 1
        %s224 = smul.addr %s223, 8
        %s225 = scalar_lea.vmem [#allocation5], %s224
        // Predicated region
        $region37: #{tpu_custom_call.1} parent=31 // pred_check
          %p226 = pneg %p80
        $region38: #{tpu_custom_call.1} parent=31 // pred_check_branch
          %228 = sbr.rel (%p226) target = $region40
        $region39: #{tpu_custom_call.1} parent=31 // pred_region
          %230 = dma.done %s222, 128
        $region40: #{tpu_custom_call.1} parent=31 // pred_fallthru
          _
        %s231 = sand.u32 %s21, 1
        %s232 = scalar_lea.sflag [#allocation6], %s231
        %s233 = sand.u32 %s93, 1
        %s234 = scalar_lea.vmem [#allocation7], %s233
        // Predicated region
        $region41: #{tpu_custom_call.1} parent=31 // pred_check
          %p235 = pneg %p106
        $region42: #{tpu_custom_call.1} parent=31 // pred_check_branch
          %237 = sbr.rel (%p235) target = $region44
        $region43: #{tpu_custom_call.1} parent=31 // pred_region
          %239 = dma.done %s232, 16
        $region44: #{tpu_custom_call.1} parent=31 // pred_fallthru
          _
        %p240 = pneg %p54
        %p241 = pneg %p51
        %s242 = sand.u32 %s21, 1
        %s243 = scalar_lea.sflag [#allocation6], %s242
        %s244 = sand.u32 %s67, 1
        %s245 = smul.addr %s244, 8
        %s246 = scalar_lea.vmem [#allocation5], %s245
        %p247 = pneg %p80
        %p248 = pneg %p77
        %s249 = sand.u32 %s21, 1
        %s250 = scalar_lea.sflag [#allocation6], %s249
        %s251 = sand.u32 %s93, 1
        %s252 = scalar_lea.vmem [#allocation7], %s251
        %p253 = pneg %p106
        %p254 = pneg %p103
        %p255 = pneg %p134
        %p256 = pneg %p131
        %s257 = sand.u32 %s121, 1
        %s258 = scalar_lea.sflag [#allocation4], %s257
        %s259 = sand.u32 %s121, 1
        %s260 = smul.addr %s259, 64
        %s261 = scalar_lea.vmem [#allocation8], %s260
        %s262 = smul.u32 8, %s26
        %s263 = smul.u32 8, %s26
        %v265 = vld [vmem:[#allocation2] sm:$0xff]
        %v266 = vld [vmem:[#allocation2 + $0x8] sm:$0xff]
        %v267 = vld [vmem:[#allocation2 + $0x10] sm:$0xff]
        %v268 = vld [vmem:[#allocation2 + $0x18] sm:$0xff]
        %v269 = vld [vmem:[#allocation2 + $0x20] sm:$0xff]
        %v270 = vld [vmem:[#allocation2 + $0x28] sm:$0xff]
        %v271 = vld [vmem:[#allocation2 + $0x30] sm:$0xff]
        %v272 = vld [vmem:[#allocation2 + $0x38] sm:$0xff]
        %v273 = vpack.c.bf16 %v266, %v265
        %v274 = vpack.c.bf16 %v268, %v267
        %v275 = vpack.c.bf16 %v270, %v269
        %v276 = vpack.c.bf16 %v272, %v271
        %v277 = vld [vmem:[%s225] sm:$0xf]
        %v278 = vld [vmem:[%s225 + $0x4] sm:$0xf]
        %v279 = vld [vmem:[%s234] sm:$0x1]
        %v281 = vperm.slane %v279, 0
        %v285 = vunpack.c.l.b16 %v277
        %v286 = vunpack.c.l.b16 %v278
        %v287 = vpack.c.b16 %v286, %v285
        %vm289 = vcmask 130048
        %v291 = vsel %vm289, %v273, 0
        %v294 = vsel %vm289, %v274, 0
        %v297 = vsel %vm289, %v275, 0
        %v300 = vsel %vm289, %v276, 0
        %302 = vmatpush.bf16.msra.mxu0 0
        %303 = vmatpush.bf16.msra.mxu0 0
        %304 = vmatpush.bf16.msra.mxu0 0
        %305 = vmatpush.bf16.msra.mxu0 0
        %306 = vmatpush.bf16.msra.mxu0 0
        %307 = vmatpush.bf16.msra.mxu0 0
        %308 = vmatpush.bf16.msra.mxu0 0
        %309 = vmatpush.bf16.msra.mxu0 %v287
        %310 = vmatmul.bf16.gmra.mxu0 %v291
        %v311 = vpop.f32.mrf.mxu0
        %v312 = vadd.f32 %v281, %v311
        %v313 = vpop.f32.mrf.mxu0
        %v314 = vadd.f32 %v281, %v313
        %315 = vmatmul.bf16.gmra.mxu0 %v294
        %v316 = vpop.f32.mrf.mxu0
        %v317 = vadd.f32 %v281, %v316
        %v318 = vpop.f32.mrf.mxu0
        %v319 = vadd.f32 %v281, %v318
        %320 = vmatmul.bf16.gmra.mxu0 %v297
        %v321 = vpop.f32.mrf.mxu0
        %v322 = vadd.f32 %v281, %v321
        %v323 = vpop.f32.mrf.mxu0
        %v324 = vadd.f32 %v281, %v323
        %325 = vmatmul.bf16.gmra.mxu0 %v300
        %v326 = vpop.f32.mrf.mxu0
        %v327 = vadd.f32 %v281, %v326
        %v328 = vpop.f32.mrf.mxu0
        %v329 = vadd.f32 %v281, %v328
        %330 = vdwg.mxu0
        %331 = vst [vmem:[%s261] sm:$0xff] %v312
        %332 = vst [vmem:[%s261 + $0x8] sm:$0xff] %v314
        %333 = vst [vmem:[%s261 + $0x10] sm:$0xff] %v317
        %334 = vst [vmem:[%s261 + $0x18] sm:$0xff] %v319
        %335 = vst [vmem:[%s261 + $0x20] sm:$0xff] %v322
        %336 = vst [vmem:[%s261 + $0x28] sm:$0xff] %v324
        %337 = vst [vmem:[%s261 + $0x30] sm:$0xff] %v327
        %338 = vst [vmem:[%s261 + $0x38] sm:$0xff] %v329
        %s339 = sand.u32 %s121, 1
        %s340 = scalar_lea.sflag [#allocation4], %s339
        %s341 = sand.u32 %s121, 1
        %s342 = smul.addr %s341, 64
        %s343 = scalar_lea.vmem [#allocation8], %s342
        // Predicated region
        $region45: #{tpu_custom_call.1} parent=31 // pred_check
          %p344 = pneg %p131
        $region46: #{tpu_custom_call.1} parent=31 // pred_check_branch
          %346 = sbr.rel (%p344) target = $region48
        $region47: #{tpu_custom_call.1} parent=31 // pred_region
          %s347 = smul.u32 8, %s26
          %349 = vsyncadd %s340, 0
          %s350 = smul.addr %s25, 8
          %s351 = sadd.s32 %s347, %s350
          %s352 = smul.addr %s351, 8
          %s353 = scalar_lea.hbm %s3, %s352
          %s354 = sshll.u32 %s343, 4
          %s355 = int_to_ptr.vmem [resolvable:$true] %s354
          %s356 = sshll.u32 %s353, 4
          %s357 = int_to_ptr.hbm [resolvable:$true] %s356
          %362 = dma.vmem_to_hbm [thread:$0]  %s355, 1024, %s357, %s340, 128, 128, 8
        $region48: #{tpu_custom_call.1} parent=31 // pred_fallthru
          _
      $region32: #{tpu_custom_call.1} parent=5 // pred_fallthru
        _
      %p363 = scmp.le.s32.totalorder 2, %s16
      // Predicated region
      $region49: #{tpu_custom_call.1} parent=5 // pred_check
        %p364 = pneg %p363
      $region50: #{tpu_custom_call.1} parent=5 // pred_check_branch
        %366 = sbr.rel (%p364) target = $region52
      $region51: #{tpu_custom_call.1} parent=5 // pred_region
        %s367 = ssub.s32 %s16, 2
        // Predicated region
        $region53: #{tpu_custom_call.1} parent=51 // pred_check
          %p368 = pneg %p137
        $region54: #{tpu_custom_call.1} parent=51 // pred_check_branch
          %370 = sbr.rel (%p368) target = $region56
        $region55: #{tpu_custom_call.1} parent=51 // pred_region
          %s371 = sand.u32 %s122, 1
          %s372 = scalar_lea.sflag [#allocation4], %s371
          %s373 = sand.u32 %s122, 1
          %s374 = smul.addr %s373, 64
          %s375 = scalar_lea.vmem [#allocation8], %s374
          %377 = dma.done %s372, 1024
        $region56: #{tpu_custom_call.1} parent=51 // pred_fallthru
          _
      $region52: #{tpu_custom_call.1} parent=5 // pred_fallthru
        _
    $region6: #{tpu_custom_call.1} parent=1 // loop_footer
      %s20 = sadd.s32 1, %s16
    $region7: #{tpu_custom_call.1} parent=1 // loop_footer_branch
      %15 = sbr.rel target = $region3
    $region8: #{tpu_custom_call.1} parent=1 // loop_exit
      _
    %378 = vsyncpa [#allocation3], 1
    %s379 = scalar_lea.sflag [#allocation3], 1
    %380 = vsyncpa %s379, 1
    %381 = vsyncpa [#allocation6], 1
    %s382 = scalar_lea.sflag [#allocation6], 1
    %383 = vsyncpa %s382, 1
    %384 = vsyncpa [#allocation4], 1
    %s385 = scalar_lea.sflag [#allocation4], 1
    %386 = vsyncpa %s385, 1

</llo_original>
